<compile_context>
chip_gen: v6e
topology: v6e:2x2x1
jax: 0.10.0
libtpu: 0.0.40
codegen_flags: <defaults>
</compile_context>

<pallas_src>
import functools
import math

import jax
import jax.numpy as jnp
from jax.experimental import pallas as pl
from jax.experimental.pallas import tpu as pltpu


# ------------------------- hardware-aware knobs --------------------------------

def _vmem_capacity_bytes():
    try:
        return int(pltpu.get_tpu_info().vmem_capacity_bytes)
    except Exception:
        return 128 * 1024 * 1024          # v5e/v6e default assumption


_VMEM_BYTES = _vmem_capacity_bytes()
_SMALL_VMEM = _VMEM_BYTES <= 64 * 1024 * 1024       # v7x: 64 MiB per TensorCore
_TILE_CAP = 256 if _SMALL_VMEM else 512             # smaller tiles on v7x
_VMEM_LIMIT = min(int(_VMEM_BYTES * 3 // 4), 96 * 1024 * 1024)


def _choose_row_tile(m, cap=None):
    cap = _TILE_CAP if cap is None else cap
    for t in (512, 256, 128, 64, 32, 16, 8):
        if t <= cap and t <= m and m % t == 0:
            return t
    return m


def _choose_col_tile(n, cap=None):
    """Lane-dim tile: multiple of 128 dividing n (capped), else the whole dim."""
    cap = _TILE_CAP if cap is None else cap
    for t in (512, 256, 128):
        if t <= cap and t <= n and n % t == 0:
            return t
    return n


# --------------------------- Pallas kernels ------------------------------------

def _rmsnorm_kernel(x_ref, o_ref, *, scale):
    # SimpleRMSNorm: F.normalize(x, dim=-1) * dim**-0.5
    x = x_ref[...]
    ssq = jnp.sum(x * x, axis=-1, keepdims=True)
    o_ref[...] = x * (jax.lax.rsqrt(jnp.maximum(ssq, 1e-24)) * scale)


def rmsnorm(x2d, scale):
    M, D = x2d.shape
    tm = _choose_row_tile(M)
    return pl.pallas_call(
        functools.partial(_rmsnorm_kernel, scale=scale),
        out_shape=jax.ShapeDtypeStruct((M, D), x2d.dtype),
        grid=(M // tm,),
        in_specs=[pl.BlockSpec((tm, D), lambda i: (i, 0))],
        out_specs=pl.BlockSpec((tm, D), lambda i: (i, 0)),
        compiler_params=pltpu.CompilerParams(dimension_semantics=("parallel",)),
    )(x2d)


def _linear_kernel(x_ref, w_ref, b_ref, o_ref):
    o_ref[...] = jnp.dot(x_ref[...].astype(jnp.bfloat16), w_ref[...],
                         preferred_element_type=jnp.float32) + b_ref[...]


def linear(x2d, w, b):
    # Output head: rows tiled, output columns tiled (streamable for big vocabs).
    M, Din = x2d.shape
    Dout = w.shape[1]
    tm = _choose_row_tile(M)
    tn = _choose_col_tile(Dout)
    return pl.pallas_call(
        _linear_kernel,
        out_shape=jax.ShapeDtypeStruct((M, Dout), jnp.float32),
        grid=(M // tm, Dout // tn),
        in_specs=[pl.BlockSpec((tm, Din), lambda i, j: (i, 0)),
                  pl.BlockSpec((Din, tn), lambda i, j: (0, j)),
                  pl.BlockSpec((1, tn), lambda i, j: (0, j))],
        out_specs=pl.BlockSpec((tm, tn), lambda i, j: (i, j)),
        compiler_params=pltpu.CompilerParams(
            dimension_semantics=("parallel", "parallel"),
            vmem_limit_bytes=_VMEM_LIMIT),
    )(x2d, w, b)


def _ffn_kernel(x_ref, w13_ref, w2_ref, o_ref, xn_ref, *, norm_scale, th):
    # Fused: xn = RMSNorm(x); out = x + w2( SiLU(w1 xn) * (w3 xn) ).
    # Hidden dim tiled on grid axis 1; accumulate directly into resident o_ref.
    k = pl.program_id(1)

    @pl.when(k == 0)
    def _():
        x = x_ref[...]
        ssq = jnp.sum(x * x, axis=-1, keepdims=True)
        xn_ref[...] = (x * (jax.lax.rsqrt(jnp.maximum(ssq, 1e-24)) * norm_scale)
                       ).astype(jnp.bfloat16)
        o_ref[...] = x                                 # start from the residual

    xn = xn_ref[...]
    # One wide dot: [tm, D] x [D, 2*th] -> [w1-tile | w3-tile] activations.
    h13 = jnp.dot(xn, w13_ref[...], preferred_element_type=jnp.float32)
    h1 = h13[:, :th]
    h3 = h13[:, th:]
    g = (h1 * jax.nn.sigmoid(h1)) * h3                 # SiLU(w1 x) * (w3 x)
    o_ref[...] += jnp.dot(g.astype(jnp.bfloat16), w2_ref[...],
                          preferred_element_type=jnp.float32)


def ffn_block(x3d, w13, w2, *, norm_scale):
    B, N, D = x3d.shape
    M = B * N
    H = w2.shape[0]
    th = _choose_col_tile(H)            # must match the packing in init_params
    tm = _choose_row_tile(M)
    x2d = x3d.reshape(M, D)
    out = pl.pallas_call(
        functools.partial(_ffn_kernel, norm_scale=norm_scale, th=th),
        out_shape=jax.ShapeDtypeStruct((M, D), jnp.float32),
        grid=(M // tm, H // th),
        in_specs=[pl.BlockSpec((tm, D), lambda i, k: (i, 0)),
                  pl.BlockSpec((D, 2 * th), lambda i, k: (0, k)),
                  pl.BlockSpec((th, D), lambda i, k: (k, 0))],
        out_specs=pl.BlockSpec((tm, D), lambda i, k: (i, 0)),
        scratch_shapes=[pltpu.VMEM((tm, D), jnp.bfloat16)],
        compiler_params=pltpu.CompilerParams(
            dimension_semantics=("parallel", "arbitrary"),
            vmem_limit_bytes=_VMEM_LIMIT),
    )(x2d, w13, w2)
    return out.reshape(B, N, D)


def _attn_kernel(lam_ref, x_ref, wqkv_ref, bqkv_ref, wo_ref, bo_ref, o_ref,
                 xn_ref, *, E, norm_scale, attn_scale, out_gain):
    # Grid = (batch, head).  Per step: one head's streamed weights, fused
    # RMSNorm (h==0 only) + packed QKV projection + dual softmax + P@V +
    # per-head W_o accumulation into the resident output block.
    h = pl.program_id(1)

    @pl.when(h == 0)
    def _():
        x = x_ref[0]
        ssq = jnp.sum(x * x, axis=-1, keepdims=True)
        xn_ref[...] = (x * (jax.lax.rsqrt(jnp.maximum(ssq, 1e-24)) * norm_scale)
                       ).astype(jnp.bfloat16)
        o_ref[0] = jnp.zeros_like(o_ref[0])

    xn = xn_ref[...]                                          # [N, D] bf16
    # One wide MXU-filling projection: [N, D] x [D, 5E] -> [q1|q2|k1|k2|v].
    qkv = jnp.dot(xn, wqkv_ref[0], preferred_element_type=jnp.float32) + bqkv_ref[0]
    q1 = qkv[:, 0 * E:1 * E].astype(jnp.bfloat16)
    q2 = qkv[:, 1 * E:2 * E].astype(jnp.bfloat16)
    k1 = qkv[:, 2 * E:3 * E].astype(jnp.bfloat16)
    k2 = qkv[:, 3 * E:4 * E].astype(jnp.bfloat16)
    v = qkv[:, 4 * E:5 * E].astype(jnp.bfloat16)

    def _softmax(a):
        m = jnp.max(a, axis=-1, keepdims=True)
        e = jnp.exp(a - m)
        return (e / jnp.sum(e, axis=-1, keepdims=True)).astype(jnp.bfloat16)

    # Only ONE NxN score matrix is live at a time (peak-VMEM / vreg saver).
    # TODO(synk): flash-style query/KV tiling with online softmax for long N.
    a1 = jnp.einsum('ne,me->nm', q1, k1,
                    preferred_element_type=jnp.float32) * attn_scale
    o1 = jnp.dot(_softmax(a1), v, preferred_element_type=jnp.float32)
    a2 = jnp.einsum('ne,me->nm', q2, k2,
                    preferred_element_type=jnp.float32) * attn_scale
    o2 = jnp.dot(_softmax(a2), v, preferred_element_type=jnp.float32)
    o_h = o1 - lam_ref[0] * o2                                # differential attn

    o_ref[0] += jnp.dot(o_h.astype(jnp.bfloat16), wo_ref[0],
                        preferred_element_type=jnp.float32)   # += O_h @ W_o[h]

    @pl.when(h == pl.num_programs(1) - 1)
    def _():
        # Matches reference: (O_concat @ W_o + b_o) * (1 - lambda_init) + residual.
        o_ref[0] = (o_ref[0] + bo_ref[...]) * out_gain + x_ref[0]


def attention_block(x, lam, layer, *, heads, norm_scale, attn_scale, out_gain):
    B, N, D = x.shape
    wqkv, bqkv = layer["wqkv"], layer["bqkv"]
    wo, bo = layer["wo"], layer["bo"]
    E = wo.shape[1]
    lam3 = lam.reshape(heads, 1, 1).astype(jnp.float32)
    kernel = functools.partial(_attn_kernel, E=E, norm_scale=norm_scale,
                               attn_scale=attn_scale, out_gain=out_gain)
    return pl.pallas_call(
        kernel,
        out_shape=jax.ShapeDtypeStruct((B, N, D), jnp.float32),
        grid=(B, heads),
        in_specs=[
            pl.BlockSpec((1, 1, 1), lambda b, h: (h, 0, 0)),        # lambda_full[h]
            pl.BlockSpec((1, N, D), lambda b, h: (b, 0, 0)),        # x (resident over h)
            pl.BlockSpec((1, D, 5 * E), lambda b, h: (h, 0, 0)),    # packed QKV w, streamed
            pl.BlockSpec((1, 1, 5 * E), lambda b, h: (h, 0, 0)),    # packed QKV b, streamed
            pl.BlockSpec((1, E, D), lambda b, h: (h, 0, 0)),        # W_o head slice, streamed
            pl.BlockSpec((1, D), lambda b, h: (0, 0)),              # b_o
        ],
        out_specs=pl.BlockSpec((1, N, D), lambda b, h: (b, 0, 0)),  # resident accumulator
        scratch_shapes=[pltpu.VMEM((N, D), jnp.bfloat16)],          # RMSNorm(x), reused per head
        compiler_params=pltpu.CompilerParams(
            dimension_semantics=("parallel", "arbitrary"),
            vmem_limit_bytes=_VMEM_LIMIT),
    )(lam3, x, wqkv, bqkv, wo, bo)


# --------------------------- parameters & model ---------------------------------

def init_params(key, dim, heads, depth, output_dim):
    E = dim                      # embedding_dim == dim in this configuration
    D = dim
    H = 4 * dim
    th = _choose_col_tile(H)     # hidden tile used by the FFN kernel
    bf16 = jnp.bfloat16

    def nrm(k, shape, std=0.02, dtype=jnp.float32):
        return (std * jax.random.normal(k, shape, jnp.float32)).astype(dtype)

    keys = jax.random.split(key, 3 + depth)
    params = {
        "embed": jax.random.normal(keys[0], (output_dim, dim), jnp.float32),
        "head_w": nrm(keys[1], (dim, output_dim), dtype=bf16),
        "head_b": jnp.zeros((1, output_dim), jnp.float32),
        "layers": [],
    }
    for li in range(depth):
        k = jax.random.split(keys[3 + li], 16)
        # Per-head projections packed column-wise as [q1 | q2 | k1 | k2 | v].
        wqkv = nrm(k[0], (heads, D, 5 * E), dtype=bf16)
        bqkv = nrm(k[1], (heads, 1, 5 * E))
        # W_o stored per head: [h, E, D] so the head concat is never materialized.
        wo = nrm(k[2], (heads, E, D), dtype=bf16)
        bo = jnp.zeros((1, D), jnp.float32)
        # FFN w1/w3 packed per hidden tile: columns [w1-tile | w3-tile] repeated.
        w1 = nrm(k[3], (D, H), dtype=bf16)
        w3 = nrm(k[4], (D, H), dtype=bf16)
        nk = H // th
        w13 = jnp.concatenate(
            [w1.reshape(D, nk, 1, th), w3.reshape(D, nk, 1, th)], axis=2
        ).reshape(D, 2 * H)
        layer = dict(
            wqkv=wqkv, bqkv=bqkv, wo=wo, bo=bo,
            lq1=0.1 * jax.random.normal(k[5], (heads, E), jnp.float32),
            lk1=0.1 * jax.random.normal(k[6], (heads, E), jnp.float32),
            lq2=0.1 * jax.random.normal(k[7], (heads, E), jnp.float32),
            lk2=0.1 * jax.random.normal(k[8], (heads, E), jnp.float32),
            w13=w13,
            w2=nrm(k[9], (H, D), dtype=bf16),
        )
        params["layers"].append(layer)
    return params


def differential_transformer(params, tokens, *, dim, heads, output_dim,
                             lambda_init):
    B, N = tokens.shape
    norm_scale = dim ** (-0.5)
    attn_scale = 1.0 / math.sqrt(dim)     # s = 1/sqrt(d), d == dim (== E) here

    x = params["embed"][tokens]           # [B, N, dim] embedding gather (glue)
    x = rmsnorm(x.reshape(B * N, dim), norm_scale).reshape(B, N, dim)

    for layer in params["layers"]:
        # per-head lambda_full (tiny scalar math, plain JAX)
        lam1 = jnp.exp(jnp.sum(layer["lq1"] * layer["lk1"], axis=-1))
        lam2 = jnp.exp(jnp.sum(layer["lq2"] * layer["lk2"], axis=-1))
        lam = (lam1 - lam2 + lambda_init).astype(jnp.float32)      # [heads]
        # fused norm + multi-head differential attention + W_o + residual
        x = attention_block(x, lam, layer, heads=heads, norm_scale=norm_scale,
                            attn_scale=attn_scale, out_gain=1.0 - lambda_init)
        # fused norm + SwiGLU FFN + residual
        x = ffn_block(x, layer["w13"], layer["w2"], norm_scale=norm_scale)

    out = linear(x.reshape(B * N, dim), params["head_w"], params["head_b"])
    return out.reshape(B, N, output_dim)


# ----------------------------------- main ---------------------------------------

if __name__ == "__main__":
    dim = 64          # model / embedding dim
    heads = 2
    depth = 2
    output_dim = 32   # vocab size / number of classes
    B, N = 2, 16      # batch, sequence length
    lambda_init = 0.8 - 0.6 * math.exp(-0.3 * (depth - 1))

    key = jax.random.PRNGKey(0)
    pkey, tkey = jax.random.split(key)
    params = init_params(pkey, dim, heads, depth, output_dim)
    tokens = jax.random.randint(tkey, (B, N), 0, output_dim, dtype=jnp.int32)

    out = differential_transformer(params, tokens, dim=dim, heads=heads,
                                   output_dim=output_dim,
                                   lambda_init=lambda_init)
    out = jax.block_until_ready(out)
    assert out.shape == (B, N, output_dim)
    assert bool(jnp.all(jnp.isfinite(out)))
    print("KERNEL_OK")
</pallas_src>

<mosaic_0001>
module attributes {stable_mosaic.version = 11 : i64} {
  func.func @_rmsnorm_kernel(%arg0: i32, %arg1: memref<32x64xf32, #tpu.memory_space<vmem>>, %arg2: memref<32x64xf32, #tpu.memory_space<vmem>>) attributes {dimension_semantics = [#tpu.dimension_semantics<parallel>], iteration_bounds = array<i64: 1>, scalar_prefetch = 0 : i64, scratch_operands = 0 : i64, tpu.core_type = #tpu.core_type<tc>, window_params = [{transform_indices = @transform_0, window_bounds = array<i64: 32, 64>}, {transform_indices = @transform_1, window_bounds = array<i64: 32, 64>}]} {
    %c0 = arith.constant 0 : index
    %c0_0 = arith.constant 0 : index
    %0 = vector.load %arg1[%c0, %c0_0] : memref<32x64xf32, #tpu.memory_space<vmem>>, vector<32x64xf32>
    %1 = arith.mulf %0, %0 : vector<32x64xf32>
    %cst = arith.constant dense<0.000000e+00> : vector<32xf32>
    %2 = vector.multi_reduction <add>, %1, %cst [1] : vector<32x64xf32> to vector<32xf32>
    %3 = vector.shape_cast %2 : vector<32xf32> to vector<32x1xf32>
    %cst_1 = arith.constant 1.000000e-24 : f32
    %4 = vector.broadcast %cst_1 : f32 to vector<32x1xf32>
    %5 = arith.maximumf %3, %4 : vector<32x1xf32>
    %6 = math.rsqrt %5 : vector<32x1xf32>
    %cst_2 = arith.constant 1.250000e-01 : f32
    %7 = vector.broadcast %cst_2 : f32 to vector<32x1xf32>
    %8 = arith.mulf %6, %7 : vector<32x1xf32>
    %9 = vector.broadcast %8 : vector<32x1xf32> to vector<32x64xf32>
    %10 = arith.mulf %0, %9 : vector<32x64xf32>
    %c0_3 = arith.constant 0 : index
    %c0_4 = arith.constant 0 : index
    %11 = vector.load %arg2[%c0_3, %c0_4] : memref<32x64xf32, #tpu.memory_space<vmem>>, vector<32x64xf32>
    tpu.vector_store %arg2[%c0_3, %c0_4], %10 {strides = array<i32>} : memref<32x64xf32, #tpu.memory_space<vmem>>, vector<32x64xf32>,
    return
  }
  func.func @transform_0(%arg0: i32) -> (i32, i32) {
    %c0_i32 = arith.constant 0 : i32
    %c0_i32_0 = arith.constant 0 : i32
    return %arg0, %c0_i32 : i32, i32
  }
  func.func @transform_1(%arg0: i32) -> (i32, i32) {
    %c0_i32 = arith.constant 0 : i32
    %c0_i32_0 = arith.constant 0 : i32
    return %arg0, %c0_i32 : i32, i32
  }
}

</mosaic_0001>

<llo_original>
// kernel: tpu_custom_call.1
$region0: #{tpu_custom_call.1}
  #allocation0 [shape = 'u32[]', space=smem, size = 0x4, offset = 0x4, fixed_abs, tag = 'smem constant byte address 0x4 - core index']
  #allocation1 [shape = 'u32[144,128]{1,0:T(1,128)}', space=vmem, size = 0x12000, scoped, tag = 'internal scratch']
  %s0 = inlined_call_operand.hbm [shape: f32[32,64], index: 0, kind: input, shape index: {}]
  %s1 = inlined_call_operand.hbm [shape: f32[32,64], index: 1, kind: output, shape index: {}]
  %s2 = sld [smem:[#allocation0]]
  $region18: #{tpu_custom_call.1} parent=0
    _
  %s4 = ssub.s32 1, %s2
  %s5 = scalar_select 0, %s4, %s2
  $region1: #{tpu_custom_call.1} parent=0
    #allocation2 [shape = 'u8[16384]{0}', space=vmem, size = 0x4000, scoped, tag = 'input window, operand 0, single buffered']
    #allocation3 [shape = 's32[1]{0}', space=sflag, size = 0x4, scoped, tag = 'scoped memory for tpu_custom_call.1']
    #allocation4 [shape = 's32[1]{0}', space=sflag, size = 0x4, scoped, tag = 'scoped memory for tpu_custom_call.1']
    #allocation5 [shape = 'u8[16384]{0}', space=vmem, size = 0x4000, scoped, tag = 'output window, operand 0, single buffered']
    %6 = vsyncpa [#allocation3], 0
    %7 = vsyncpa [#allocation4], 0
    // Predicated region
    $region2: #{tpu_custom_call.1} parent=1 // pred_check
      _
    $region3: #{tpu_custom_call.1} parent=1 // pred_check_branch
      %9 = sbr.rel (0) target = $region5
    $region4: #{tpu_custom_call.1} parent=1 // pred_region
      %s11 = ssub.s32 512, 512
      %12 = vsyncadd [#allocation3], %s11
      %s13 = sshll.u32 [#allocation2], 4
      %s14 = int_to_ptr.vmem [resolvable:$true] %s13
      %19 = dma.hbm_to_vmem [thread:$0]  %s0, 512, %s14, [#allocation3], 128, 128, 8
    $region5: #{tpu_custom_call.1} parent=1 // pred_fallthru
      _
    // Predicated region
    $region6: #{tpu_custom_call.1} parent=1 // pred_check
      _
    $region7: #{tpu_custom_call.1} parent=1 // pred_check_branch
      %21 = sbr.rel (0) target = $region9
    $region8: #{tpu_custom_call.1} parent=1 // pred_region
      %22 = dma.done [#allocation3], 512
    $region9: #{tpu_custom_call.1} parent=1 // pred_fallthru
      _
    %v23 = vld [vmem:[#allocation2] sm:$0xff]
    %v24 = vld [vmem:[#allocation2 + $0x8] sm:$0xff]
    %v25 = vld [vmem:[#allocation2 + $0x10] sm:$0xff]
    %v26 = vld [vmem:[#allocation2 + $0x18] sm:$0xff]
    %v27 = vmul.f32 %v23, %v23
    %v28 = vmul.f32 %v24, %v24
    %v29 = vmul.f32 %v25, %v25
    %v30 = vmul.f32 %v26, %v26
    %vm31 = vcmask 523264
    %v32 = vsel %vm31, %v27, 0.0
    %33 = vadd.xlane.f32.xlu0 %v32
    %v34 = vpop.xlane.xlu0 %33
    %v35 = vsel %vm31, %v28, 0.0
    %36 = vadd.xlane.f32.xlu0 %v35
    %v37 = vpop.xlane.xlu0 %36
    %v38 = vsel %vm31, %v29, 0.0
    %39 = vadd.xlane.f32.xlu0 %v38
    %v40 = vpop.xlane.xlu0 %39
    %v41 = vsel %vm31, %v30, 0.0
    %42 = vadd.xlane.f32.xlu0 %v41
    %v43 = vpop.xlane.xlu0 %42
    %v44 = vmax.f32 %v34, 1e-24
    %v45 = vmax.f32 %v37, 1e-24
    %v46 = vmax.f32 %v40, 1e-24
    %v47 = vmax.f32 %v43, 1e-24
    %v48 = vrsqrt.pop %v44
    %v49 = vrsqrt.pop %v45
    %v50 = vrsqrt.pop %v46
    %v51 = vrsqrt.pop %v47
    %v52 = vmul.f32 %v48, 0.125
    %v53 = vmul.f32 %v49, 0.125
    %v54 = vmul.f32 %v50, 0.125
    %v55 = vmul.f32 %v51, 0.125
    %v56 = vmul.f32 %v23, %v52
    %v57 = vmul.f32 %v24, %v53
    %v58 = vmul.f32 %v25, %v54
    %v59 = vmul.f32 %v26, %v55
    %60 = vst.msk [vmem:[#allocation5] sm:$0xff] %vm31, %v56
    %61 = vst.msk [vmem:[#allocation5 + $0x8] sm:$0xff] %vm31, %v57
    %62 = vst.msk [vmem:[#allocation5 + $0x10] sm:$0xff] %vm31, %v58
    %63 = vst.msk [vmem:[#allocation5 + $0x18] sm:$0xff] %vm31, %v59
    // Predicated region
    $region10: #{tpu_custom_call.1} parent=1 // pred_check
      _
    $region11: #{tpu_custom_call.1} parent=1 // pred_check_branch
      %65 = sbr.rel (0) target = $region13
    $region12: #{tpu_custom_call.1} parent=1 // pred_region
      %s67 = ssub.s32 512, 512
      %68 = vsyncadd [#allocation4], %s67
      %s69 = sshll.u32 [#allocation5], 4
      %s70 = int_to_ptr.vmem [resolvable:$true] %s69
      %75 = dma.vmem_to_hbm [thread:$0]  %s70, 512, %s1, [#allocation4], 128, 128, 8
    $region13: #{tpu_custom_call.1} parent=1 // pred_fallthru
      _
    // Predicated region
    $region14: #{tpu_custom_call.1} parent=1 // pred_check
      _
    $region15: #{tpu_custom_call.1} parent=1 // pred_check_branch
      %77 = sbr.rel (0) target = $region17
    $region16: #{tpu_custom_call.1} parent=1 // pred_region
      %78 = dma.done [#allocation4], 512
    $region17: #{tpu_custom_call.1} parent=1 // pred_fallthru
      _
    %79 = vsyncpa [#allocation3], 1
    %80 = vsyncpa [#allocation4], 1

</llo_original>
